<compile_context>
chip_gen: v7x
topology: tpu7x:2x2x1
jax: 0.10.0
libtpu: 0.0.40
codegen_flags: <defaults>
</compile_context>

<pallas_src>
import functools

import jax
import jax.numpy as jnp
from jax.experimental import pallas as pl
from jax.experimental.pallas import tpu as pltpu


def _round_up(x, m):
    return (x + m - 1) // m * m


def bof_kernel(count_lane, feat_ref, idx_ref, emb_ref, w_ref, b_ref, out_ref, cacc):
    """count_lane: static lane index in emb_ref that carries the all-ones count column."""
    TILE_G, V_pad = cacc.shape
    TILE_N = idx_ref.shape[-1]

    g = pl.program_id(0)          # parallel axis over output-group blocks (v7x: 2 TCs)
    n = pl.program_id(1)          # reduction axis over token tiles (last grid dim)

    @pl.when(n == 0)
    def _init():
        cacc[...] = jnp.zeros_like(cacc)

    # --- One combined scatter/gather one-hot matmul per token tile -----------------------
    #   cacc[g_row, v] += #{ j : indices[j] == g_row  and  features[j] == v }
    # One-hots are exact in bf16 and the accumulation is f32, so this is exact.
    idx_row = idx_ref[0]                                               # [1, TILE_N] int32
    group_iota = jax.lax.broadcasted_iota(jnp.int32, (TILE_G, TILE_N), 0) + g * TILE_G
    scat_oh = (group_iota == idx_row).astype(jnp.bfloat16)             # [TILE_G, TILE_N]

    feat_col = feat_ref[0]                                             # [TILE_N, 1] int32
    vocab_iota = jax.lax.broadcasted_iota(jnp.int32, (TILE_N, V_pad), 1)
    gather_oh = (vocab_iota == feat_col).astype(jnp.bfloat16)          # [TILE_N, V_pad]

    cacc[...] += jnp.dot(scat_oh, gather_oh, preferred_element_type=jnp.float32)

    # --- Finalize (once per group block): embed, mean (exact f32 divide), linear ---------
    @pl.when(n == pl.num_programs(1) - 1)
    def _finalize():
        counts_mat = cacc[...]                                         # [TILE_G, V_pad] f32
        # sums[:, :E] = per-group embedding sums; sums[:, count_lane] = per-group token count
        sums = jnp.dot(counts_mat, emb_ref[...], preferred_element_type=jnp.float32)
        counts = sums[:, count_lane:count_lane + 1]                    # [TILE_G, 1]
        mean = sums / jnp.maximum(counts, 1.0)                         # empty group -> 0
        out_ref[...] = (jnp.dot(mean, w_ref[...], preferred_element_type=jnp.float32)
                        + b_ref[...])


def bag_of_features_forward(features, indices, emb_table, w, b, num_groups,
                            *, tile_n=128, tile_g=None):
    """features, indices: int [N]; emb_table: [V, E] f32; w: [O, E] (PyTorch layout); b: [O].

    tile_n: token-tile size (multiple of 128; 128 suits v5e, 256 suits v6e/v7x).
    """
    N = features.shape[0]
    V, E = emb_table.shape
    O = w.shape[0]
    G = num_groups

    G_pad = _round_up(G, 8)            # unmasked sublane stores; padded groups sliced off
    O_pad = _round_up(O, 128)          # lane-dense output store
    V_pad = _round_up(V, 128)          # lane-dense gather one-hot / matmul K dim
    E_pad = _round_up(E + 1, 128)      # lane-dense embeddings, +1 lane carries the counts
    N_pad = _round_up(N, tile_n)
    n_tiles = N_pad // tile_n

    if tile_g is None:
        # Split the group dim into 2 parallel blocks when it stays a multiple of 8, so
        # v7x's second TensorCore has work; the table is VMEM-resident so re-reading it
        # per block is free.
        tile_g = G_pad // 2 if (G_pad % 16 == 0) else G_pad
    assert G_pad % tile_g == 0 and tile_g % 8 == 0
    g_tiles = G_pad // tile_g

    # Padding tokens: feature id 0 (valid, harmless), group id G_pad (matches no group row).
    feat_pad = jnp.zeros((N_pad,), jnp.int32).at[:N].set(features.astype(jnp.int32))
    idx_pad = jnp.full((N_pad,), G_pad, jnp.int32).at[:N].set(indices.astype(jnp.int32))
    feat_col = feat_pad.reshape(n_tiles, tile_n, 1)      # column block -> sublane-major ids
    idx_row = idx_pad.reshape(n_tiles, 1, tile_n)        # row block   -> lane-dense ids

    # Embedding table resident in VMEM, f32 (small), with a folded all-ones count lane.
    emb_pad = jnp.zeros((V_pad, E_pad), jnp.float32)
    emb_pad = emb_pad.at[:V, :E].set(emb_table.astype(jnp.float32))
    emb_pad = emb_pad.at[:V, E].set(1.0)                 # count lane

    # Linear weights as [E_pad, O_pad]; the count-lane row stays zero so it never leaks.
    w_pad = jnp.zeros((E_pad, O_pad), jnp.float32).at[:E, :O].set(w.T.astype(jnp.float32))
    b_pad = jnp.zeros((1, O_pad), jnp.float32).at[0, :O].set(b.astype(jnp.float32))

    grid_spec = pltpu.PrefetchScalarGridSpec(
        num_scalar_prefetch=0,
        grid=(g_tiles, n_tiles),
        in_specs=[
            pl.BlockSpec((1, tile_n, 1), lambda g, n: (n, 0, 0)),     # feature ids (column)
            pl.BlockSpec((1, 1, tile_n), lambda g, n: (n, 0, 0)),     # group ids (row)
            pl.BlockSpec((V_pad, E_pad), lambda g, n: (0, 0)),        # emb table, resident
            pl.BlockSpec((E_pad, O_pad), lambda g, n: (0, 0)),        # W^T, resident
            pl.BlockSpec((1, O_pad), lambda g, n: (0, 0)),            # bias, resident
        ],
        out_specs=pl.BlockSpec((tile_g, O_pad), lambda g, n: (g, 0)),
        scratch_shapes=[pltpu.VMEM((tile_g, V_pad), jnp.float32)],    # combined count acc
    )

    # Generation-aware VMEM budget: resident buffers + double-buffered id tiles, clamped to
    # 75% of physical VMEM (64 MiB on v7x, 128 MiB on v5e/v6e), floor of 32 MiB.
    resident_bytes = 4 * (V_pad * E_pad + E_pad * O_pad + O_pad
                          + tile_g * V_pad + 2 * tile_g * O_pad)
    block_bytes = 2 * 4 * (2 * tile_n)
    try:
        phys_vmem = pltpu.get_tpu_info().vmem_capacity_bytes
    except Exception:
        phys_vmem = 64 * 1024 * 1024
    vmem_limit = int(min(max(2 * (resident_bytes + block_bytes), 32 * 1024 * 1024),
                         0.75 * phys_vmem))

    out_pad = pl.pallas_call(
        functools.partial(bof_kernel, E),
        out_shape=jax.ShapeDtypeStruct((G_pad, O_pad), jnp.float32),
        grid_spec=grid_spec,
        compiler_params=pltpu.CompilerParams(
            dimension_semantics=("parallel", "arbitrary"),
            vmem_limit_bytes=vmem_limit,
        ),
    )(feat_col, idx_row, emb_pad, w_pad, b_pad)

    return out_pad[:G, :O]


def reference_forward(features, indices, emb_table, w, b, num_groups):
    """Pure-JAX reference matching PyTorch (eval-mode) semantics."""
    emb = emb_table[features]                                    # [N, E]
    sums = jax.ops.segment_sum(emb, indices, num_segments=num_groups)
    counts = jax.ops.segment_sum(jnp.ones((features.shape[0],)), indices,
                                 num_segments=num_groups)
    mean = sums / jnp.maximum(counts, 1.0)[:, None]
    return mean @ w.T + b


if __name__ == "__main__":
    # Small shapes consistent with the module.
    feature_emb_size = 32      # E
    feature_vocab_size = 64    # V
    output_size = 16           # O
    N = 20                     # number of feature tokens (padded to one 128-token tile)
    G = 4                      # number of bags (indices.max() + 1)

    key = jax.random.PRNGKey(0)
    k_emb, k_w, k_b, k_feat, k_idx = jax.random.split(key, 5)

    emb_table = jax.random.normal(k_emb, (feature_vocab_size, feature_emb_size),
                                  dtype=jnp.float32) * 0.1
    w = jax.random.normal(k_w, (output_size, feature_emb_size), dtype=jnp.float32) * 0.1
    b = jax.random.normal(k_b, (output_size,), dtype=jnp.float32) * 0.1

    features = jax.random.randint(k_feat, (N,), 0, feature_vocab_size, dtype=jnp.int32)
    indices = jax.random.randint(k_idx, (N,), 0, G, dtype=jnp.int32)

    out = bag_of_features_forward(features, indices, emb_table, w, b, G)
    out = jax.block_until_ready(out)

    ref = reference_forward(features, indices, emb_table, w, b, G)
    assert out.shape == (G, output_size)
    # Scatter/gather counts are exact; remaining error is only MXU f32-matmul rounding.
    assert jnp.allclose(out, ref, atol=2e-2, rtol=2e-2), "mismatch vs reference"

    print("KERNEL_OK")
</pallas_src>

<mosaic_0001>
module attributes {stable_mosaic.version = 11 : i64} {
  func.func @bof_kernel(%arg0: i32, %arg1: i32, %arg2: memref<1x128x1xi32, #tpu.memory_space<vmem>>, %arg3: memref<1x1x128xi32, #tpu.memory_space<vmem>>, %arg4: memref<128x128xf32, #tpu.memory_space<vmem>>, %arg5: memref<128x128xf32, #tpu.memory_space<vmem>>, %arg6: memref<1x128xf32, #tpu.memory_space<vmem>>, %arg7: memref<8x128xf32, #tpu.memory_space<vmem>>, %arg8: memref<8x128xf32, #tpu.memory_space<vmem>>) attributes {dimension_semantics = [#tpu.dimension_semantics<parallel>, #tpu.dimension_semantics<arbitrary>], iteration_bounds = array<i64: 1, 1>, scalar_prefetch = 0 : i64, scratch_operands = 1 : i64, tpu.core_type = #tpu.core_type<tc>, window_params = [{transform_indices = @transform_0, window_bounds = array<i64: 1, 128, 1>}, {transform_indices = @transform_1, window_bounds = array<i64: 1, 1, 128>}, {pipeline_mode = #tpu.pipeline_mode<synchronous>, transform_indices = @transform_2, window_bounds = array<i64: 128, 128>}, {pipeline_mode = #tpu.pipeline_mode<synchronous>, transform_indices = @transform_3, window_bounds = array<i64: 128, 128>}, {pipeline_mode = #tpu.pipeline_mode<synchronous>, transform_indices = @transform_4, window_bounds = array<i64: 1, 128>}, {transform_indices = @transform_5, window_bounds = array<i64: 8, 128>}]} {
    %c0_i32 = arith.constant 0 : i32
    %0 = arith.cmpi eq, %arg1, %c0_i32 : i32
    %1 = arith.extui %0 : i1 to i32
    %c0_i32_0 = arith.constant 0 : i32
    %2 = arith.cmpi ne, %1, %c0_i32_0 : i32
    scf.if %2 {
      %cst_12 = arith.constant 0.000000e+00 : f32
      %29 = vector.broadcast %cst_12 : f32 to vector<8x128xf32>
      %c0_13 = arith.constant 0 : index
      %c0_14 = arith.constant 0 : index
      %30 = vector.load %arg8[%c0_13, %c0_14] : memref<8x128xf32, #tpu.memory_space<vmem>>, vector<8x128xf32>
      tpu.vector_store %arg8[%c0_13, %c0_14], %29 {strides = array<i32>} : memref<8x128xf32, #tpu.memory_space<vmem>>, vector<8x128xf32>,
    } else {
    }
    %c0 = arith.constant 0 : index
    %c0_1 = arith.constant 0 : index
    %c0_2 = arith.constant 0 : index
    %3 = vector.load %arg3[%c0, %c0_1, %c0_2] : memref<1x1x128xi32, #tpu.memory_space<vmem>>, vector<1x1x128xi32>
    %4 = vector.shape_cast %3 : vector<1x1x128xi32> to vector<1x128xi32>
    %5 = tpu.iota {dimensions = array<i32: 0>} : vector<8x128xi32>
    %c8_i32 = arith.constant 8 : i32
    %6 = arith.muli %arg0, %c8_i32 : i32
    %7 = vector.broadcast %6 : i32 to vector<8x128xi32>
    %8 = arith.addi %5, %7 : vector<8x128xi32>
    %9 = vector.broadcast %4 : vector<1x128xi32> to vector<8x128xi32>
    %10 = arith.cmpi eq, %8, %9 : vector<8x128xi32>
    %11 = arith.extui %10 : vector<8x128xi1> to vector<8x128xi32>
    %12 = arith.sitofp %11 : vector<8x128xi32> to vector<8x128xf32>
    %13 = arith.truncf %12 : vector<8x128xf32> to vector<8x128xbf16>
    %c0_3 = arith.constant 0 : index
    %c0_4 = arith.constant 0 : index
    %c0_5 = arith.constant 0 : index
    %14 = vector.load %arg2[%c0_3, %c0_4, %c0_5] : memref<1x128x1xi32, #tpu.memory_space<vmem>>, vector<1x128x1xi32>
    %15 = vector.shape_cast %14 : vector<1x128x1xi32> to vector<128x1xi32>
    %16 = tpu.iota {dimensions = array<i32: 1>} : vector<128x128xi32>
    %17 = vector.broadcast %15 : vector<128x1xi32> to vector<128x128xi32>
    %18 = arith.cmpi eq, %16, %17 : vector<128x128xi32>
    %19 = arith.extui %18 : vector<128x128xi1> to vector<128x128xi32>
    %20 = arith.sitofp %19 : vector<128x128xi32> to vector<128x128xf32>
    %21 = arith.truncf %20 : vector<128x128xf32> to vector<128x128xbf16>
    %c0_6 = arith.constant 0 : index
    %c0_7 = arith.constant 0 : index
    %22 = vector.load %arg8[%c0_6, %c0_7] : memref<8x128xf32, #tpu.memory_space<vmem>>, vector<8x128xf32>
    %cst = arith.constant dense<0.000000e+00> : vector<8x128xf32>
    %23 = tpu.matmul %13, %21, %cst {dimension_numbers = #tpu.dot_dimension_numbers<[1], [0], [0], [1], [0, 0, 1, 1], [], []>} : vector<8x128xbf16>, vector<128x128xbf16>, vector<8x128xf32> -> vector<8x128xf32>
    %24 = arith.addf %22, %23 : vector<8x128xf32>
    %c0_8 = arith.constant 0 : index
    %c0_9 = arith.constant 0 : index
    %25 = vector.load %arg8[%c0_8, %c0_9] : memref<8x128xf32, #tpu.memory_space<vmem>>, vector<8x128xf32>
    tpu.vector_store %arg8[%c0_8, %c0_9], %24 {strides = array<i32>} : memref<8x128xf32, #tpu.memory_space<vmem>>, vector<8x128xf32>,
    %c0_i32_10 = arith.constant 0 : i32
    %26 = arith.cmpi eq, %arg1, %c0_i32_10 : i32
    %27 = arith.extui %26 : i1 to i32
    %c0_i32_11 = arith.constant 0 : i32
    %28 = arith.cmpi ne, %27, %c0_i32_11 : i32
    scf.if %28 {
      %c0_12 = arith.constant 0 : index
      %c0_13 = arith.constant 0 : index
      %29 = vector.load %arg8[%c0_12, %c0_13] : memref<8x128xf32, #tpu.memory_space<vmem>>, vector<8x128xf32>
      %c0_14 = arith.constant 0 : index
      %c0_15 = arith.constant 0 : index
      %30 = vector.load %arg4[%c0_14, %c0_15] : memref<128x128xf32, #tpu.memory_space<vmem>>, vector<128x128xf32>
      %cst_16 = arith.constant dense<0.000000e+00> : vector<8x128xf32>
      %31 = tpu.matmul %29, %30, %cst_16 {dimension_numbers = #tpu.dot_dimension_numbers<[1], [0], [0], [1], [0, 0, 1, 1], [], []>} : vector<8x128xf32>, vector<128x128xf32>, vector<8x128xf32> -> vector<8x128xf32>
      %32 = vector.extract_strided_slice %31 {offsets = [0, 32], sizes = [8, 1], strides = [1, 1]} : vector<8x128xf32> to vector<8x1xf32>
      %cst_17 = arith.constant 1.000000e+00 : f32
      %33 = vector.broadcast %cst_17 : f32 to vector<8x1xf32>
      %34 = arith.maximumf %32, %33 : vector<8x1xf32>
      %35 = vector.broadcast %34 : vector<8x1xf32> to vector<8x128xf32>
      %36 = arith.divf %31, %35 : vector<8x128xf32>
      %c0_18 = arith.constant 0 : index
      %c0_19 = arith.constant 0 : index
      %37 = vector.load %arg5[%c0_18, %c0_19] : memref<128x128xf32, #tpu.memory_space<vmem>>, vector<128x128xf32>
      %cst_20 = arith.constant dense<0.000000e+00> : vector<8x128xf32>
      %38 = tpu.matmul %36, %37, %cst_20 {dimension_numbers = #tpu.dot_dimension_numbers<[1], [0], [0], [1], [0, 0, 1, 1], [], []>} : vector<8x128xf32>, vector<128x128xf32>, vector<8x128xf32> -> vector<8x128xf32>
      %c0_21 = arith.constant 0 : index
      %c0_22 = arith.constant 0 : index
      %39 = vector.load %arg6[%c0_21, %c0_22] : memref<1x128xf32, #tpu.memory_space<vmem>>, vector<1x128xf32>
      %40 = vector.broadcast %39 : vector<1x128xf32> to vector<8x128xf32>
      %41 = arith.addf %38, %40 : vector<8x128xf32>
      %c0_23 = arith.constant 0 : index
      %c0_24 = arith.constant 0 : index
      %42 = vector.load %arg7[%c0_23, %c0_24] : memref<8x128xf32, #tpu.memory_space<vmem>>, vector<8x128xf32>
      tpu.vector_store %arg7[%c0_23, %c0_24], %41 {strides = array<i32>} : memref<8x128xf32, #tpu.memory_space<vmem>>, vector<8x128xf32>,
    } else {
    }
    return
  }
  func.func @transform_0(%arg0: i32, %arg1: i32) -> (i32, i32, i32) {
    %c0_i32 = arith.constant 0 : i32
    %c0_i32_0 = arith.constant 0 : i32
    %c0_i32_1 = arith.constant 0 : i32
    return %arg1, %c0_i32, %c0_i32_0 : i32, i32, i32
  }
  func.func @transform_1(%arg0: i32, %arg1: i32) -> (i32, i32, i32) {
    %c0_i32 = arith.constant 0 : i32
    %c0_i32_0 = arith.constant 0 : i32
    %c0_i32_1 = arith.constant 0 : i32
    return %arg1, %c0_i32, %c0_i32_0 : i32, i32, i32
  }
  func.func @transform_2(%arg0: i32, %arg1: i32) -> (i32, i32) {
    %c0_i32 = arith.constant 0 : i32
    %c0_i32_0 = arith.constant 0 : i32
    %c0_i32_1 = arith.constant 0 : i32
    return %c0_i32, %c0_i32_0 : i32, i32
  }
  func.func @transform_3(%arg0: i32, %arg1: i32) -> (i32, i32) {
    %c0_i32 = arith.constant 0 : i32
    %c0_i32_0 = arith.constant 0 : i32
    %c0_i32_1 = arith.constant 0 : i32
    return %c0_i32, %c0_i32_0 : i32, i32
  }
  func.func @transform_4(%arg0: i32, %arg1: i32) -> (i32, i32) {
    %c0_i32 = arith.constant 0 : i32
    %c0_i32_0 = arith.constant 0 : i32
    %c0_i32_1 = arith.constant 0 : i32
    return %c0_i32, %c0_i32_0 : i32, i32
  }
  func.func @transform_5(%arg0: i32, %arg1: i32) -> (i32, i32) {
    %c0_i32 = arith.constant 0 : i32
    %c0_i32_0 = arith.constant 0 : i32
    return %arg0, %c0_i32 : i32, i32
  }
}

</mosaic_0001>

<llo_original>
// kernel: tpu_custom_call.1
$region0: #{tpu_custom_call.1}
  #allocation0 [shape = 'u32[]', space=smem, size = 0x4, offset = 0x4, fixed_abs, tag = 'smem constant byte address 0x4 - core index']
  #allocation1 [shape = 'u32[144,128]{1,0:T(1,128)}', space=vmem, size = 0x12000, scoped, tag = 'internal scratch']
  #allocation2 [shape = 'f32[8,128]{1,0:T(8,128)}', space=vmem, size = 0x1000, scoped, tag = 'scratch operand']
  %s0 = inlined_call_operand.vmem [shape: s32[1,128,1], index: 0, kind: input, shape index: {}]
  %s1 = inlined_call_operand.vmem [shape: s32[1,1,128], index: 1, kind: input, shape index: {}]
  %s2 = inlined_call_operand.vmem [shape: f32[128,128], index: 2, kind: input, shape index: {}]
  %s3 = inlined_call_operand.hbm [shape: f32[128,128], index: 3, kind: input, shape index: {}]
  %s4 = inlined_call_operand.vmem [shape: f32[1,128], index: 4, kind: input, shape index: {}]
  %s5 = inlined_call_operand.hbm [shape: f32[8,128], index: 5, kind: output, shape index: {}]
  %s6 = sld [smem:[#allocation0]]
  $region42: #{tpu_custom_call.1} parent=0
    _
  %s8 = ssub.s32 1, %s6
  %s9 = scalar_select 0, %s8, %s6
  $region1: #{tpu_custom_call.1} parent=0
    #allocation3 [shape = 'u8[65536]{0}', space=vmem, size = 0x10000, scoped, tag = 'input window, operand 3, single buffered']
    #allocation4 [shape = 's32[1]{0}', space=sflag, size = 0x4, scoped, tag = 'scoped memory for tpu_custom_call.1']
    #allocation5 [shape = 's32[1]{0}', space=sflag, size = 0x4, scoped, tag = 'scoped memory for tpu_custom_call.1']
    #allocation6 [shape = 'u8[4096]{0}', space=vmem, size = 0x1000, scoped, tag = 'output window, operand 0, single buffered']
    %10 = vsyncpa [#allocation4], 0
    %11 = vsyncpa [#allocation5], 0
    // Predicated region
    $region2: #{tpu_custom_call.1} parent=1 // pred_check
      _
    $region3: #{tpu_custom_call.1} parent=1 // pred_check_branch
      %13 = sbr.rel (0) target = $region5
    $region4: #{tpu_custom_call.1} parent=1 // pred_region
      _
    $region5: #{tpu_custom_call.1} parent=1 // pred_fallthru
      _
    // Predicated region
    $region6: #{tpu_custom_call.1} parent=1 // pred_check
      _
    $region7: #{tpu_custom_call.1} parent=1 // pred_check_branch
      %15 = sbr.rel (0) target = $region9
    $region8: #{tpu_custom_call.1} parent=1 // pred_region
      _
    $region9: #{tpu_custom_call.1} parent=1 // pred_fallthru
      _
    // Predicated region
    $region10: #{tpu_custom_call.1} parent=1 // pred_check
      _
    $region11: #{tpu_custom_call.1} parent=1 // pred_check_branch
      %17 = sbr.rel (0) target = $region13
    $region12: #{tpu_custom_call.1} parent=1 // pred_region
      _
    $region13: #{tpu_custom_call.1} parent=1 // pred_fallthru
      _
    // Predicated region
    $region14: #{tpu_custom_call.1} parent=1 // pred_check
      _
    $region15: #{tpu_custom_call.1} parent=1 // pred_check_branch
      %19 = sbr.rel (0) target = $region17
    $region16: #{tpu_custom_call.1} parent=1 // pred_region
      %s21 = ssub.s32 2048, 2048
      %22 = vsyncadd [#allocation4], %s21
      %s23 = sshll.u32 [#allocation3], 4
      %s24 = int_to_ptr.vmem [resolvable:$true] %s23
      %29 = dma.hbm_to_vmem [thread:$0]  %s3, 2048, %s24, [#allocation4], 128, 128, 8
    $region17: #{tpu_custom_call.1} parent=1 // pred_fallthru
      _
    // Predicated region
    $region18: #{tpu_custom_call.1} parent=1 // pred_check
      _
    $region19: #{tpu_custom_call.1} parent=1 // pred_check_branch
      %31 = sbr.rel (0) target = $region21
    $region20: #{tpu_custom_call.1} parent=1 // pred_region
      _
    $region21: #{tpu_custom_call.1} parent=1 // pred_fallthru
      _
    // Predicated region
    $region22: #{tpu_custom_call.1} parent=1 // pred_check
      _
    $region23: #{tpu_custom_call.1} parent=1 // pred_check_branch
      %33 = sbr.rel (0) target = $region25
    $region24: #{tpu_custom_call.1} parent=1 // pred_region
      %34 = dma.done [#allocation4], 2048
    $region25: #{tpu_custom_call.1} parent=1 // pred_fallthru
      _
    %p36 = scmp.eq.s32.totalorder 0, 0
    // Predicated region
    $region26: #{tpu_custom_call.1} parent=1 // pred_check
      %p37 = pneg %p36
    $region27: #{tpu_custom_call.1} parent=1 // pred_check_branch
      %39 = sbr.rel (%p37) target = $region29
    $region28: #{tpu_custom_call.1} parent=1 // pred_region
      %40 = vst [vmem:[#allocation2] sm:$0xff] 0.0
    $region29: #{tpu_custom_call.1} parent=1 // pred_fallthru
      _
    %v41 = vld [vmem:[%s1] sm:$0x1]
    %v42 = vlaneseq
    %v43 = vshrl.u32 %v42, 7
    %s44 = smul.u32 0, 8
    %v45 = vstv %s44
    %v46 = vadd.s32 %v43, %v45
    %v47 = vlaneseq
    %v48 = vshrl.u32 %v47, 7
    %v49 = vsub.s32 0, %v48
    %v50 = vrot.slane %v41, %v49
    %vm51 = vcmp.eq.s32.totalorder %v46, %v50
    %v52 = vsel %vm51, 1, 0
    %v53 = vcvt.s32.f32 %v52
    %v54 = vpack.c.bf16 %v53, %v53
    %v55 = vld [vmem:[%s0] sm:$0xff]
    %v56 = vld [vmem:[%s0 + $0x8] sm:$0xff]
    %v57 = vld [vmem:[%s0 + $0x10] sm:$0xff]
    %v58 = vld [vmem:[%s0 + $0x18] sm:$0xff]
    %v59 = vld [vmem:[%s0 + $0x20] sm:$0xff]
    %v60 = vld [vmem:[%s0 + $0x28] sm:$0xff]
    %v61 = vld [vmem:[%s0 + $0x30] sm:$0xff]
    %v62 = vld [vmem:[%s0 + $0x38] sm:$0xff]
    %v63 = vld [vmem:[%s0 + $0x40] sm:$0xff]
    %v64 = vld [vmem:[%s0 + $0x48] sm:$0xff]
    %v65 = vld [vmem:[%s0 + $0x50] sm:$0xff]
    %v66 = vld [vmem:[%s0 + $0x58] sm:$0xff]
    %v67 = vld [vmem:[%s0 + $0x60] sm:$0xff]
    %v68 = vld [vmem:[%s0 + $0x68] sm:$0xff]
    %v69 = vld [vmem:[%s0 + $0x70] sm:$0xff]
    %v70 = vld [vmem:[%s0 + $0x78] sm:$0xff]
    %v71 = vlaneseq
    %v72 = vand.u32 %v71, 127
    %73 = vset.pattern.permute.xlu0 0
    %74 = vperm.xlu0 %73, %v55
    %v75 = vpop.permute.xlu0 %74
    %76 = vset.pattern.permute.xlu0 0
    %77 = vperm.xlu0 %76, %v56
    %v78 = vpop.permute.xlu0 %77
    %79 = vset.pattern.permute.xlu0 0
    %80 = vperm.xlu0 %79, %v57
    %v81 = vpop.permute.xlu0 %80
    %82 = vset.pattern.permute.xlu0 0
    %83 = vperm.xlu0 %82, %v58
    %v84 = vpop.permute.xlu0 %83
    %85 = vset.pattern.permute.xlu0 0
    %86 = vperm.xlu0 %85, %v59
    %v87 = vpop.permute.xlu0 %86
    %88 = vset.pattern.permute.xlu0 0
    %89 = vperm.xlu0 %88, %v60
    %v90 = vpop.permute.xlu0 %89
    %91 = vset.pattern.permute.xlu0 0
    %92 = vperm.xlu0 %91, %v61
    %v93 = vpop.permute.xlu0 %92
    %94 = vset.pattern.permute.xlu0 0
    %95 = vperm.xlu0 %94, %v62
    %v96 = vpop.permute.xlu0 %95
    %97 = vset.pattern.permute.xlu0 0
    %98 = vperm.xlu0 %97, %v63
    %v99 = vpop.permute.xlu0 %98
    %100 = vset.pattern.permute.xlu0 0
    %101 = vperm.xlu0 %100, %v64
    %v102 = vpop.permute.xlu0 %101
    %103 = vset.pattern.permute.xlu0 0
    %104 = vperm.xlu0 %103, %v65
    %v105 = vpop.permute.xlu0 %104
    %106 = vset.pattern.permute.xlu0 0
    %107 = vperm.xlu0 %106, %v66
    %v108 = vpop.permute.xlu0 %107
    %109 = vset.pattern.permute.xlu0 0
    %110 = vperm.xlu0 %109, %v67
    %v111 = vpop.permute.xlu0 %110
    %112 = vset.pattern.permute.xlu0 0
    %113 = vperm.xlu0 %112, %v68
    %v114 = vpop.permute.xlu0 %113
    %115 = vset.pattern.permute.xlu0 0
    %116 = vperm.xlu0 %115, %v69
    %v117 = vpop.permute.xlu0 %116
    %118 = vset.pattern.permute.xlu0 0
    %119 = vperm.xlu0 %118, %v70
    %v120 = vpop.permute.xlu0 %119
    %vm121 = vcmp.eq.s32.totalorder %v72, %v75
    %vm122 = vcmp.eq.s32.totalorder %v72, %v78
    %vm123 = vcmp.eq.s32.totalorder %v72, %v81
    %vm124 = vcmp.eq.s32.totalorder %v72, %v84
    %vm125 = vcmp.eq.s32.totalorder %v72, %v87
    %vm126 = vcmp.eq.s32.totalorder %v72, %v90
    %vm127 = vcmp.eq.s32.totalorder %v72, %v93
    %vm128 = vcmp.eq.s32.totalorder %v72, %v96
    %vm129 = vcmp.eq.s32.totalorder %v72, %v99
    %vm130 = vcmp.eq.s32.totalorder %v72, %v102
    %vm131 = vcmp.eq.s32.totalorder %v72, %v105
    %vm132 = vcmp.eq.s32.totalorder %v72, %v108
    %vm133 = vcmp.eq.s32.totalorder %v72, %v111
    %vm134 = vcmp.eq.s32.totalorder %v72, %v114
    %vm135 = vcmp.eq.s32.totalorder %v72, %v117
    %vm136 = vcmp.eq.s32.totalorder %v72, %v120
    %v137 = vsel %vm121, 1, 0
    %v138 = vsel %vm122, 1, 0
    %v139 = vsel %vm123, 1, 0
    %v140 = vsel %vm124, 1, 0
    %v141 = vsel %vm125, 1, 0
    %v142 = vsel %vm126, 1, 0
    %v143 = vsel %vm127, 1, 0
    %v144 = vsel %vm128, 1, 0
    %v145 = vsel %vm129, 1, 0
    %v146 = vsel %vm130, 1, 0
    %v147 = vsel %vm131, 1, 0
    %v148 = vsel %vm132, 1, 0
    %v149 = vsel %vm133, 1, 0
    %v150 = vsel %vm134, 1, 0
    %v151 = vsel %vm135, 1, 0
    %v152 = vsel %vm136, 1, 0
    %v153 = vcvt.s32.f32 %v137
    %v154 = vcvt.s32.f32 %v138
    %v155 = vcvt.s32.f32 %v139
    %v156 = vcvt.s32.f32 %v140
    %v157 = vcvt.s32.f32 %v141
    %v158 = vcvt.s32.f32 %v142
    %v159 = vcvt.s32.f32 %v143
    %v160 = vcvt.s32.f32 %v144
    %v161 = vcvt.s32.f32 %v145
    %v162 = vcvt.s32.f32 %v146
    %v163 = vcvt.s32.f32 %v147
    %v164 = vcvt.s32.f32 %v148
    %v165 = vcvt.s32.f32 %v149
    %v166 = vcvt.s32.f32 %v150
    %v167 = vcvt.s32.f32 %v151
    %v168 = vcvt.s32.f32 %v152
    %v169 = vpack.c.bf16 %v154, %v153
    %v170 = vpack.c.bf16 %v156, %v155
    %v171 = vpack.c.bf16 %v158, %v157
    %v172 = vpack.c.bf16 %v160, %v159
    %v173 = vpack.c.bf16 %v162, %v161
    %v174 = vpack.c.bf16 %v164, %v163
    %v175 = vpack.c.bf16 %v166, %v165
    %v176 = vpack.c.bf16 %v168, %v167
    %v177 = vld [vmem:[#allocation2] sm:$0xff]
    %178 = vmatprep.subr.bf16.mxu0 0
    %179 = vmatpush1.bf16.msra.mxu0 %v169
    %180 = vmatprep.subr.bf16.mxu0 0
    %181 = vmatpush1.bf16.msra.mxu0 %v170
    %182 = vmatprep.subr.bf16.mxu0 0
    %183 = vmatpush1.bf16.msra.mxu0 %v171
    %184 = vmatprep.subr.bf16.mxu0 0
    %185 = vmatpush1.bf16.msra.mxu0 %v172
    %186 = vmatprep.subr.bf16.mxu0 0
    %187 = vmatpush1.bf16.msra.mxu0 %v173
    %188 = vmatprep.subr.bf16.mxu0 0
    %189 = vmatpush1.bf16.msra.mxu0 %v174
    %190 = vmatprep.subr.bf16.mxu0 0
    %191 = vmatpush1.bf16.msra.mxu0 %v175
    %192 = vmatprep.subr.bf16.mxu0 0
    %193 = vmatpush1.bf16.msra.mxu0 %v176
    %194 = vmatprep.subr.bf16.mxu0 0
    %195 = vmatpush1.bf16.msra.mxu0 0
    %196 = vmatprep.subr.bf16.mxu0 0
    %197 = vmatpush1.bf16.msra.mxu0 0
    %198 = vmatprep.subr.bf16.mxu0 0
    %199 = vmatpush1.bf16.msra.mxu0 0
    %200 = vmatprep.subr.bf16.mxu0 0
    %201 = vmatpush1.bf16.msra.mxu0 0
    %202 = vmatprep.subr.bf16.mxu0 0
    %203 = vmatpush1.bf16.msra.mxu0 0
    %204 = vmatprep.subr.bf16.mxu0 0
    %205 = vmatpush1.bf16.msra.mxu0 0
    %206 = vmatprep.subr.bf16.mxu0 0
    %207 = vmatpush1.bf16.msra.mxu0 0
    %208 = vmatprep.subr.bf16.mxu0 0
    %209 = vmatpush1.bf16.msra.mxu0 0
    %210 = vmatprep.mubr.bf16.mxu0 0
    %211 = vmatmul.mubr.bf16.gmra.mrb[0].mxu0 %v54
    %v212 = vpop.f32.mrb[0].mxu0
    %v213 = vadd.f32 0.0, %v212
    %v214 = vpop.f32.mrb[0].mxu0
    %v215 = vpop.f32.mrb[0].mxu0
    %v216 = vpop.f32.mrb[0].mxu0
    %217 = vdwg.mxu0
    %v218 = vadd.f32 %v177, %v213
    %219 = vst [vmem:[#allocation2] sm:$0xff] %v218
    // Predicated region
    $region30: #{tpu_custom_call.1} parent=1 // pred_check
      %p220 = pneg %p36
    $region31: #{tpu_custom_call.1} parent=1 // pred_check_branch
      %222 = sbr.rel (%p220) target = $region33
    $region32: #{tpu_custom_call.1} parent=1 // pred_region
      %v223 = vld [vmem:[#allocation2] sm:$0xff]
      %v224 = vld [vmem:[%s2] sm:$0xff]
      %v225 = vld [vmem:[%s2 + $0x8] sm:$0xff]
      %v226 = vld [vmem:[%s2 + $0x10] sm:$0xff]
      %v227 = vld [vmem:[%s2 + $0x18] sm:$0xff]
      %v228 = vld [vmem:[%s2 + $0x20] sm:$0xff]
      %v229 = vld [vmem:[%s2 + $0x28] sm:$0xff]
      %v230 = vld [vmem:[%s2 + $0x30] sm:$0xff]
      %v231 = vld [vmem:[%s2 + $0x38] sm:$0xff]
      %v232 = vld [vmem:[%s2 + $0x40] sm:$0xff]
      %v233 = vld [vmem:[%s2 + $0x48] sm:$0xff]
      %v234 = vld [vmem:[%s2 + $0x50] sm:$0xff]
      %v235 = vld [vmem:[%s2 + $0x58] sm:$0xff]
      %v236 = vld [vmem:[%s2 + $0x60] sm:$0xff]
      %v237 = vld [vmem:[%s2 + $0x68] sm:$0xff]
      %v238 = vld [vmem:[%s2 + $0x70] sm:$0xff]
      %v239 = vld [vmem:[%s2 + $0x78] sm:$0xff]
      %240 = vmatprep.subr.mxu0 0.0
      %241 = vmatpush1.msra.mxu0 %v224
      %242 = vmatprep.subr.mxu0 0.0
      %243 = vmatpush1.msra.mxu0 %v225
      %244 = vmatprep.subr.mxu0 0.0
      %245 = vmatpush1.msra.mxu0 %v226
      %246 = vmatprep.subr.mxu0 0.0
      %247 = vmatpush1.msra.mxu0 %v227
      %248 = vmatprep.subr.mxu0 0.0
      %249 = vmatpush1.msra.mxu0 %v228
      %250 = vmatprep.subr.mxu0 0.0
      %251 = vmatpush1.msra.mxu0 %v229
      %252 = vmatprep.subr.mxu0 0.0
      %253 = vmatpush1.msra.mxu0 %v230
      %254 = vmatprep.subr.mxu0 0.0
      %255 = vmatpush1.msra.mxu0 %v231
      %256 = vmatprep.subr.mxu0 0.0
      %257 = vmatpush1.msra.mxu0 %v232
      %258 = vmatprep.subr.mxu0 0.0
      %259 = vmatpush1.msra.mxu0 %v233
      %260 = vmatprep.subr.mxu0 0.0
      %261 = vmatpush1.msra.mxu0 %v234
      %262 = vmatprep.subr.mxu0 0.0
      %263 = vmatpush1.msra.mxu0 %v235
      %264 = vmatprep.subr.mxu0 0.0
      %265 = vmatpush1.msra.mxu0 %v236
      %266 = vmatprep.subr.mxu0 0.0
      %267 = vmatpush1.msra.mxu0 %v237
      %268 = vmatprep.subr.mxu0 0.0
      %269 = vmatpush1.msra.mxu0 %v238
      %270 = vmatprep.subr.mxu0 0.0
      %271 = vmatpush1.msra.mxu0 %v239
      %272 = vmatprep.subr.mxu0 0.0
      %273 = vmatpush1.msra.mxu0 0.0
      %274 = vmatprep.subr.mxu0 0.0
      %275 = vmatpush1.msra.mxu0 0.0
      %276 = vmatprep.subr.mxu0 0.0
      %277 = vmatpush1.msra.mxu0 0.0
      %278 = vmatprep.subr.mxu0 0.0
      %279 = vmatpush1.msra.mxu0 0.0
      %280 = vmatprep.subr.mxu0 0.0
      %281 = vmatpush1.msra.mxu0 0.0
      %282 = vmatprep.subr.mxu0 0.0
      %283 = vmatpush1.msra.mxu0 0.0
      %284 = vmatprep.subr.mxu0 0.0
      %285 = vmatpush1.msra.mxu0 0.0
      %286 = vmatprep.subr.mxu0 0.0
      %287 = vmatpush1.msra.mxu0 0.0
      %288 = vmatprep.subr.mxu0 0.0
      %289 = vmatpush1.msra.mxu0 0.0
      %290 = vmatprep.subr.mxu0 0.0
      %291 = vmatpush1.msra.mxu0 0.0
      %292 = vmatprep.subr.mxu0 0.0
      %293 = vmatpush1.msra.mxu0 0.0
      %294 = vmatprep.subr.mxu0 0.0
      %295 = vmatpush1.msra.mxu0 0.0
      %296 = vmatprep.subr.mxu0 0.0
      %297 = vmatpush1.msra.mxu0 0.0
      %298 = vmatprep.subr.mxu0 0.0
      %299 = vmatpush1.msra.mxu0 0.0
      %300 = vmatprep.subr.mxu0 0.0
      %301 = vmatpush1.msra.mxu0 0.0
      %302 = vmatprep.subr.mxu0 0.0
      %303 = vmatpush1.msra.mxu0 0.0
      %304 = vmatprep.mubr.f32.mxu0 0.0
      %305 = vmatmul.mubr.f32.gmra.mrb[0].mxu0 %v223
      %v306 = vpop.f32.mrb[0].mxu0
      %v307 = vadd.f32 0.0, %v306
      %v308 = vpop.f32.mrb[0].mxu0
      %309 = vdwg.mxu0
      %v310 = vmax.f32 %v307, 1.0
      %312 = vset.pattern.permute.xlu0 32
      %313 = vperm.xlu0 %312, %v310
      %v314 = vpop.permute.xlu0 %313
      %v316 = vrcp.pop %v314
      %v317 = vmul.f32 %v307, %v316
      %v318 = vld [vmem:[#allocation3] sm:$0xff]
      %v319 = vld [vmem:[#allocation3 + $0x8] sm:$0xff]
      %v320 = vld [vmem:[#allocation3 + $0x10] sm:$0xff]
      %v321 = vld [vmem:[#allocation3 + $0x18] sm:$0xff]
      %v322 = vld [vmem:[#allocation3 + $0x20] sm:$0xff]
      %v323 = vld [vmem:[#allocation3 + $0x28] sm:$0xff]
      %v324 = vld [vmem:[#allocation3 + $0x30] sm:$0xff]
      %v325 = vld [vmem:[#allocation3 + $0x38] sm:$0xff]
      %v326 = vld [vmem:[#allocation3 + $0x40] sm:$0xff]
      %v327 = vld [vmem:[#allocation3 + $0x48] sm:$0xff]
      %v328 = vld [vmem:[#allocation3 + $0x50] sm:$0xff]
      %v329 = vld [vmem:[#allocation3 + $0x58] sm:$0xff]
      %v330 = vld [vmem:[#allocation3 + $0x60] sm:$0xff]
      %v331 = vld [vmem:[#allocation3 + $0x68] sm:$0xff]
      %v332 = vld [vmem:[#allocation3 + $0x70] sm:$0xff]
      %v333 = vld [vmem:[#allocation3 + $0x78] sm:$0xff]
      %v334 = vld [vmem:[%s4] sm:$0x1]
      %v336 = vlaneseq
      %v337 = vshrl.u32 %v336, 7
      %v338 = vsub.s32 0, %v337
      %v339 = vrot.slane %v334, %v338
      %341 = vmatprep.subr.mxu0 0.0
      %342 = vmatpush1.msra.mxu0 %v318
      %343 = vmatprep.subr.mxu0 0.0
      %344 = vmatpush1.msra.mxu0 %v319
      %345 = vmatprep.subr.mxu0 0.0
      %346 = vmatpush1.msra.mxu0 %v320
      %347 = vmatprep.subr.mxu0 0.0
      %348 = vmatpush1.msra.mxu0 %v321
      %349 = vmatprep.subr.mxu0 0.0
      %350 = vmatpush1.msra.mxu0 %v322
      %351 = vmatprep.subr.mxu0 0.0
      %352 = vmatpush1.msra.mxu0 %v323
      %353 = vmatprep.subr.mxu0 0.0
      %354 = vmatpush1.msra.mxu0 %v324
      %355 = vmatprep.subr.mxu0 0.0
      %356 = vmatpush1.msra.mxu0 %v325
      %357 = vmatprep.subr.mxu0 0.0
      %358 = vmatpush1.msra.mxu0 %v326
      %359 = vmatprep.subr.mxu0 0.0
      %360 = vmatpush1.msra.mxu0 %v327
      %361 = vmatprep.subr.mxu0 0.0
      %362 = vmatpush1.msra.mxu0 %v328
      %363 = vmatprep.subr.mxu0 0.0
      %364 = vmatpush1.msra.mxu0 %v329
      %365 = vmatprep.subr.mxu0 0.0
      %366 = vmatpush1.msra.mxu0 %v330
      %367 = vmatprep.subr.mxu0 0.0
      %368 = vmatpush1.msra.mxu0 %v331
      %369 = vmatprep.subr.mxu0 0.0
      %370 = vmatpush1.msra.mxu0 %v332
      %371 = vmatprep.subr.mxu0 0.0
      %372 = vmatpush1.msra.mxu0 %v333
      %373 = vmatprep.subr.mxu0 0.0
      %374 = vmatpush1.msra.mxu0 0.0
      %375 = vmatprep.subr.mxu0 0.0
      %376 = vmatpush1.msra.mxu0 0.0
      %377 = vmatprep.subr.mxu0 0.0
      %378 = vmatpush1.msra.mxu0 0.0
      %379 = vmatprep.subr.mxu0 0.0
      %380 = vmatpush1.msra.mxu0 0.0
      %381 = vmatprep.subr.mxu0 0.0
      %382 = vmatpush1.msra.mxu0 0.0
      %383 = vmatprep.subr.mxu0 0.0
      %384 = vmatpush1.msra.mxu0 0.0
      %385 = vmatprep.subr.mxu0 0.0
      %386 = vmatpush1.msra.mxu0 0.0
      %387 = vmatprep.subr.mxu0 0.0
      %388 = vmatpush1.msra.mxu0 0.0
      %389 = vmatprep.subr.mxu0 0.0
      %390 = vmatpush1.msra.mxu0 0.0
      %391 = vmatprep.subr.mxu0 0.0
      %392 = vmatpush1.msra.mxu0 0.0
      %393 = vmatprep.subr.mxu0 0.0
      %394 = vmatpush1.msra.mxu0 0.0
      %395 = vmatprep.subr.mxu0 0.0
      %396 = vmatpush1.msra.mxu0 0.0
      %397 = vmatprep.subr.mxu0 0.0
      %398 = vmatpush1.msra.mxu0 0.0
      %399 = vmatprep.subr.mxu0 0.0
      %400 = vmatpush1.msra.mxu0 0.0
      %401 = vmatprep.subr.mxu0 0.0
      %402 = vmatpush1.msra.mxu0 0.0
      %403 = vmatprep.subr.mxu0 0.0
      %404 = vmatpush1.msra.mxu0 0.0
      %405 = vmatprep.mubr.f32.mxu0 0.0
      %406 = vmatmul.mubr.f32.gmra.mrb[0].mxu0 %v317
      %v407 = vpop.f32.mrb[0].mxu0
      %v408 = vadd.f32 %v339, %v407
      %v409 = vpop.f32.mrb[0].mxu0
      %410 = vdwg.mxu0
      %411 = vst [vmem:[#allocation6] sm:$0xff] %v408
    $region33: #{tpu_custom_call.1} parent=1 // pred_fallthru
      _
    // Predicated region
    $region34: #{tpu_custom_call.1} parent=1 // pred_check
      _
    $region35: #{tpu_custom_call.1} parent=1 // pred_check_branch
      %413 = sbr.rel (0) target = $region37
    $region36: #{tpu_custom_call.1} parent=1 // pred_region
      %s415 = ssub.s32 128, 128
      %416 = vsyncadd [#allocation5], %s415
      %s418 = sshll.u32 [#allocation6], 4
      %s419 = int_to_ptr.vmem [resolvable:$true] %s418
      %421 = dma.vmem_to_hbm [thread:$0]  %s419, 128, %s5, [#allocation5]
    $region37: #{tpu_custom_call.1} parent=1 // pred_fallthru
      _
    // Predicated region
    $region38: #{tpu_custom_call.1} parent=1 // pred_check
      _
    $region39: #{tpu_custom_call.1} parent=1 // pred_check_branch
      %423 = sbr.rel (0) target = $region41
    $region40: #{tpu_custom_call.1} parent=1 // pred_region
      %424 = dma.done [#allocation5], 128
    $region41: #{tpu_custom_call.1} parent=1 // pred_fallthru
      _
    %425 = vsyncpa [#allocation4], 1
    %426 = vsyncpa [#allocation5], 1

</llo_original>
